<compile_context>
chip_gen: v6e
topology: v6e:2x2x1
jax: 0.10.0
libtpu: 0.0.40
codegen_flags: <defaults>
</compile_context>

<pallas_src>
import jax
import jax.numpy as jnp
from jax.experimental import pallas as pl
from jax.experimental.pallas import tpu as pltpu


def _round_up(x, m):
    return ((x + m - 1) // m) * m


def _predictor_kernel(x_ref, w1_ref, b1_ref, w2_ref, b2_ref, out_ref):
    # Fused layer 1 (cls + bbox heads side by side): [NB, C] @ [C, 2H]
    h = jnp.dot(x_ref[...], w1_ref[...], preferred_element_type=jnp.float32)
    h = jnp.maximum(h + b1_ref[...], 0.0)           # bias + ReLU in f32
    # Fused block-diagonal layer 2: [NB, 2H] @ [2H, P]  (P lane-dense, x128)
    y = jnp.dot(h.astype(w2_ref.dtype), w2_ref[...],
                preferred_element_type=jnp.float32)
    out_ref[...] = (y + b2_ref[...]).astype(out_ref.dtype)


def custom_faster_rcnn_predictor(x, params, *, n_blk_max=512):
    """Forward pass of CustomFasterRCNNPredictor.

    x: [N, C] or [N, C, 1, 1]
    params: dict with w1c/b1c/w2c/b2c (cls head) and w1b/b1b/w2b/b2b (bbox head),
            weights stored as [in_features, out_features].
    returns: (scores [N, num_classes], bbox_deltas [N, num_classes*4])
    """
    if x.ndim == 4:
        assert x.shape[2:] == (1, 1), (
            f"x has the wrong shape, expecting the last two dimensions to be "
            f"[1,1] instead of {list(x.shape[2:])}"
        )
    x2d = x.reshape(x.shape[0], -1)          # == torch.flatten(start_dim=1)
    n, c = x2d.shape
    out_dtype = x2d.dtype

    w1c, b1c = params["w1c"], params["b1c"]
    w2c, b2c = params["w2c"], params["b2c"]
    w1b, b1b = params["w1b"], params["b1b"]
    w2b, b2b = params["w2b"], params["b2b"]

    hidden = w1c.shape[1]
    nc = w2c.shape[1]
    nbox = w2b.shape[1]                       # num_classes * 4
    two_h = 2 * hidden

    # Lane-dense padded output slab: [pad(NC) | pad(4*NC)], both x128.
    pad_nc = _round_up(nc, 128)
    pad_nb = _round_up(nbox, 128)
    p_out = pad_nc + pad_nb

    # ---- pack fused / padded parameters (bf16 weights, f32 biases) --------
    w1 = jnp.concatenate([w1c, w1b], axis=1).astype(jnp.bfloat16)    # [C, 2H]
    b1 = jnp.concatenate(
        [b1c.reshape(1, -1), b1b.reshape(1, -1)], axis=1).astype(jnp.float32)

    w2 = jnp.zeros((two_h, p_out), jnp.bfloat16)
    w2 = w2.at[:hidden, :nc].set(w2c.astype(jnp.bfloat16))
    w2 = w2.at[hidden:, pad_nc:pad_nc + nbox].set(w2b.astype(jnp.bfloat16))
    b2 = jnp.zeros((1, p_out), jnp.float32)
    b2 = b2.at[:, :nc].set(b2c.reshape(1, -1).astype(jnp.float32))
    b2 = b2.at[:, pad_nc:pad_nc + nbox].set(b2b.reshape(1, -1).astype(jnp.float32))

    # ---- tile the proposal (N) axis ---------------------------------------
    n_blk = min(n_blk_max, _round_up(max(n, 1), 8))
    n_pad = _round_up(n, n_blk)
    x_b = x2d.astype(jnp.bfloat16)
    if n_pad != n:
        x_b = jnp.pad(x_b, ((0, n_pad - n), (0, 0)))
    grid = (n_pad // n_blk,)

    cost = pl.CostEstimate(
        flops=2 * n_pad * (c * two_h + two_h * p_out),
        transcendentals=0,
        bytes_accessed=(x_b.size * 2 + w1.size * 2 + w2.size * 2
                        + b1.size * 4 + b2.size * 4 + n_pad * p_out * 4),
    )

    out = pl.pallas_call(
        _predictor_kernel,
        out_shape=jax.ShapeDtypeStruct((n_pad, p_out), jnp.float32),
        grid=grid,
        in_specs=[
            pl.BlockSpec((n_blk, c), lambda i: (i, 0)),       # x block (pipelined)
            pl.BlockSpec((c, two_h), lambda i: (0, 0)),       # W1 resident
            pl.BlockSpec((1, two_h), lambda i: (0, 0)),       # b1 resident
            pl.BlockSpec((two_h, p_out), lambda i: (0, 0)),   # W2 resident
            pl.BlockSpec((1, p_out), lambda i: (0, 0)),       # b2 resident
        ],
        out_specs=pl.BlockSpec((n_blk, p_out), lambda i: (i, 0)),
        compiler_params=pltpu.CompilerParams(
            dimension_semantics=("parallel",)),               # v7x: 2 TCs
        cost_estimate=cost,
    )(x_b, w1, b1, w2, b2)

    scores = out[:n, :nc].astype(out_dtype)
    bbox_deltas = out[:n, pad_nc:pad_nc + nbox].astype(out_dtype)
    return scores, bbox_deltas


def init_params(key, in_channels, num_classes, hidden=256, dtype=jnp.float32):
    """Deterministic synthetic init (uniform, roughly PyTorch-Linear-like scale)."""
    ks = jax.random.split(key, 8)

    def lin(kw, kb, fan_in, fan_out):
        bound = 1.0 / jnp.sqrt(fan_in)
        w = jax.random.uniform(kw, (fan_in, fan_out), dtype, -bound, bound)
        b = jax.random.uniform(kb, (1, fan_out), dtype, -bound, bound)
        return w, b

    w1c, b1c = lin(ks[0], ks[1], in_channels, hidden)
    w2c, b2c = lin(ks[2], ks[3], hidden, num_classes)
    w1b, b1b = lin(ks[4], ks[5], in_channels, hidden)
    w2b, b2b = lin(ks[6], ks[7], hidden, num_classes * 4)
    return dict(w1c=w1c, b1c=b1c, w2c=w2c, b2c=b2c,
                w1b=w1b, b1b=b1b, w2b=w2b, b2b=b2b)


def _reference(x, p):
    """Pure-JAX reference with the same bf16-operand / f32-accum precision path."""
    x2d = x.reshape(x.shape[0], -1).astype(jnp.bfloat16)

    def head(w1, b1, w2, b2):
        h = jnp.dot(x2d, w1.astype(jnp.bfloat16),
                    preferred_element_type=jnp.float32) + b1.astype(jnp.float32)
        h = jnp.maximum(h, 0.0).astype(jnp.bfloat16)
        return jnp.dot(h, w2.astype(jnp.bfloat16),
                       preferred_element_type=jnp.float32) + b2.astype(jnp.float32)

    scores = head(p["w1c"], p["b1c"], p["w2c"], p["b2c"])
    bbox = head(p["w1b"], p["b1b"], p["w2b"], p["b2b"])
    return scores.astype(x.dtype), bbox.astype(x.dtype)


if __name__ == "__main__":
    key = jax.random.PRNGKey(0)
    k_x, k_p = jax.random.split(key)

    batch = 2
    in_channels = 32
    num_classes = 8

    # 4-D input [N, C, 1, 1], as the Faster R-CNN box head emits.
    x = jax.random.normal(k_x, (batch, in_channels, 1, 1), jnp.float32)
    params = init_params(k_p, in_channels, num_classes)

    scores, bbox_deltas = custom_faster_rcnn_predictor(x, params)
    jax.block_until_ready((scores, bbox_deltas))

    ref_scores, ref_bbox = _reference(x, params)
    assert scores.shape == (batch, num_classes)
    assert bbox_deltas.shape == (batch, num_classes * 4)
    assert jnp.allclose(scores, ref_scores, atol=1e-2, rtol=1e-2)
    assert jnp.allclose(bbox_deltas, ref_bbox, atol=1e-2, rtol=1e-2)

    print("KERNEL_OK")
</pallas_src>

<mosaic_0001>
module attributes {stable_mosaic.version = 11 : i64} {
  func.func @_predictor_kernel(%arg0: i32, %arg1: memref<8x32xbf16, #tpu.memory_space<vmem>>, %arg2: memref<32x512xbf16, #tpu.memory_space<vmem>>, %arg3: memref<1x512xf32, #tpu.memory_space<vmem>>, %arg4: memref<512x256xbf16, #tpu.memory_space<vmem>>, %arg5: memref<1x256xf32, #tpu.memory_space<vmem>>, %arg6: memref<8x256xf32, #tpu.memory_space<vmem>>) attributes {dimension_semantics = [#tpu.dimension_semantics<parallel>], iteration_bounds = array<i64: 1>, scalar_prefetch = 0 : i64, scratch_operands = 0 : i64, tpu.core_type = #tpu.core_type<tc>, window_params = [{transform_indices = @transform_0, window_bounds = array<i64: 8, 32>}, {pipeline_mode = #tpu.pipeline_mode<synchronous>, transform_indices = @transform_1, window_bounds = array<i64: 32, 512>}, {pipeline_mode = #tpu.pipeline_mode<synchronous>, transform_indices = @transform_2, window_bounds = array<i64: 1, 512>}, {pipeline_mode = #tpu.pipeline_mode<synchronous>, transform_indices = @transform_3, window_bounds = array<i64: 512, 256>}, {pipeline_mode = #tpu.pipeline_mode<synchronous>, transform_indices = @transform_4, window_bounds = array<i64: 1, 256>}, {transform_indices = @transform_5, window_bounds = array<i64: 8, 256>}]} {
    %c0 = arith.constant 0 : index
    %c0_0 = arith.constant 0 : index
    %0 = vector.load %arg1[%c0, %c0_0] : memref<8x32xbf16, #tpu.memory_space<vmem>>, vector<8x32xbf16>
    %c0_1 = arith.constant 0 : index
    %c0_2 = arith.constant 0 : index
    %1 = vector.load %arg2[%c0_1, %c0_2] : memref<32x512xbf16, #tpu.memory_space<vmem>>, vector<32x512xbf16>
    %cst = arith.constant dense<0.000000e+00> : vector<8x512xf32>
    %2 = tpu.matmul %0, %1, %cst {dimension_numbers = #tpu.dot_dimension_numbers<[1], [0], [0], [1], [0, 0, 1, 1], [], []>} : vector<8x32xbf16>, vector<32x512xbf16>, vector<8x512xf32> -> vector<8x512xf32>
    %c0_3 = arith.constant 0 : index
    %c0_4 = arith.constant 0 : index
    %3 = vector.load %arg3[%c0_3, %c0_4] : memref<1x512xf32, #tpu.memory_space<vmem>>, vector<1x512xf32>
    %4 = vector.broadcast %3 : vector<1x512xf32> to vector<8x512xf32>
    %5 = arith.addf %2, %4 : vector<8x512xf32>
    %cst_5 = arith.constant 0.000000e+00 : f32
    %6 = vector.broadcast %cst_5 : f32 to vector<8x512xf32>
    %7 = arith.maximumf %5, %6 : vector<8x512xf32>
    %8 = arith.truncf %7 : vector<8x512xf32> to vector<8x512xbf16>
    %c0_6 = arith.constant 0 : index
    %c0_7 = arith.constant 0 : index
    %9 = vector.load %arg4[%c0_6, %c0_7] : memref<512x256xbf16, #tpu.memory_space<vmem>>, vector<512x256xbf16>
    %cst_8 = arith.constant dense<0.000000e+00> : vector<8x256xf32>
    %10 = tpu.matmul %8, %9, %cst_8 {dimension_numbers = #tpu.dot_dimension_numbers<[1], [0], [0], [1], [0, 0, 1, 1], [], []>} : vector<8x512xbf16>, vector<512x256xbf16>, vector<8x256xf32> -> vector<8x256xf32>
    %c0_9 = arith.constant 0 : index
    %c0_10 = arith.constant 0 : index
    %11 = vector.load %arg5[%c0_9, %c0_10] : memref<1x256xf32, #tpu.memory_space<vmem>>, vector<1x256xf32>
    %12 = vector.broadcast %11 : vector<1x256xf32> to vector<8x256xf32>
    %13 = arith.addf %10, %12 : vector<8x256xf32>
    %c0_11 = arith.constant 0 : index
    %c0_12 = arith.constant 0 : index
    %14 = vector.load %arg6[%c0_11, %c0_12] : memref<8x256xf32, #tpu.memory_space<vmem>>, vector<8x256xf32>
    tpu.vector_store %arg6[%c0_11, %c0_12], %13 {strides = array<i32>} : memref<8x256xf32, #tpu.memory_space<vmem>>, vector<8x256xf32>,
    return
  }
  func.func @transform_0(%arg0: i32) -> (i32, i32) {
    %c0_i32 = arith.constant 0 : i32
    %c0_i32_0 = arith.constant 0 : i32
    return %arg0, %c0_i32 : i32, i32
  }
  func.func @transform_1(%arg0: i32) -> (i32, i32) {
    %c0_i32 = arith.constant 0 : i32
    %c0_i32_0 = arith.constant 0 : i32
    %c0_i32_1 = arith.constant 0 : i32
    return %c0_i32, %c0_i32_0 : i32, i32
  }
  func.func @transform_2(%arg0: i32) -> (i32, i32) {
    %c0_i32 = arith.constant 0 : i32
    %c0_i32_0 = arith.constant 0 : i32
    %c0_i32_1 = arith.constant 0 : i32
    return %c0_i32, %c0_i32_0 : i32, i32
  }
  func.func @transform_3(%arg0: i32) -> (i32, i32) {
    %c0_i32 = arith.constant 0 : i32
    %c0_i32_0 = arith.constant 0 : i32
    %c0_i32_1 = arith.constant 0 : i32
    return %c0_i32, %c0_i32_0 : i32, i32
  }
  func.func @transform_4(%arg0: i32) -> (i32, i32) {
    %c0_i32 = arith.constant 0 : i32
    %c0_i32_0 = arith.constant 0 : i32
    %c0_i32_1 = arith.constant 0 : i32
    return %c0_i32, %c0_i32_0 : i32, i32
  }
  func.func @transform_5(%arg0: i32) -> (i32, i32) {
    %c0_i32 = arith.constant 0 : i32
    %c0_i32_0 = arith.constant 0 : i32
    return %arg0, %c0_i32 : i32, i32
  }
}

</mosaic_0001>

<llo_original>
// kernel: tpu_custom_call.1
$region0: #{tpu_custom_call.1}
  #allocation0 [shape = 'u32[]', space=smem, size = 0x4, offset = 0x4, fixed_abs, tag = 'smem constant byte address 0x4 - core index']
  #allocation1 [shape = 'u32[144,128]{1,0:T(1,128)}', space=vmem, size = 0x12000, scoped, tag = 'internal scratch']
  %s0 = inlined_call_operand.hbm [shape: bf16[8,32], index: 0, kind: input, shape index: {}]
  %s1 = inlined_call_operand.hbm [shape: bf16[32,512], index: 1, kind: input, shape index: {}]
  %s2 = inlined_call_operand.hbm [shape: f32[1,512], index: 2, kind: input, shape index: {}]
  %s3 = inlined_call_operand.hbm [shape: bf16[512,256], index: 3, kind: input, shape index: {}]
  %s4 = inlined_call_operand.vmem [shape: f32[1,256], index: 4, kind: input, shape index: {}]
  %s5 = inlined_call_operand.hbm [shape: f32[8,256], index: 5, kind: output, shape index: {}]
  %s6 = sld [smem:[#allocation0]]
  $region46: #{tpu_custom_call.1} parent=0
    _
  %s8 = ssub.s32 1, %s6
  %s9 = scalar_select 0, %s8, %s6
  $region1: #{tpu_custom_call.1} parent=0
    #allocation2 [shape = 'u8[2048]{0}', space=vmem, size = 0x800, scoped, tag = 'input window, operand 0, single buffered']
    #allocation3 [shape = 's32[1]{0}', space=sflag, size = 0x4, scoped, tag = 'scoped memory for tpu_custom_call.1']
    #allocation4 [shape = 's32[1]{0}', space=sflag, size = 0x4, scoped, tag = 'scoped memory for tpu_custom_call.1']
    #allocation5 [shape = 'u8[32768]{0}', space=vmem, size = 0x8000, scoped, tag = 'input window, operand 1, single buffered']
    #allocation6 [shape = 's32[1]{0}', space=sflag, size = 0x4, scoped, tag = 'scoped memory for tpu_custom_call.1']
    #allocation7 [shape = 'u8[2048]{0}', space=vmem, size = 0x800, scoped, tag = 'input window, operand 2, single buffered']
    #allocation8 [shape = 'u8[262144]{0}', space=vmem, size = 0x40000, scoped, tag = 'input window, operand 3, single buffered']
    #allocation9 [shape = 's32[1]{0}', space=sflag, size = 0x4, scoped, tag = 'scoped memory for tpu_custom_call.1']
    #allocation10 [shape = 'u8[8192]{0}', space=vmem, size = 0x2000, scoped, tag = 'output window, operand 0, single buffered']
    %10 = vsyncpa [#allocation3], 0
    %11 = vsyncpa [#allocation6], 0
    %12 = vsyncpa [#allocation9], 0
    %13 = vsyncpa [#allocation4], 0
    // Predicated region
    $region2: #{tpu_custom_call.1} parent=1 // pred_check
      _
    $region3: #{tpu_custom_call.1} parent=1 // pred_check_branch
      %15 = sbr.rel (0) target = $region5
    $region4: #{tpu_custom_call.1} parent=1 // pred_region
      %s17 = ssub.s32 64, 64
      %18 = vsyncadd [#allocation3], %s17
      %s20 = sshll.u32 [#allocation2], 4
      %s21 = int_to_ptr.vmem [resolvable:$true] %s20
      %23 = dma.hbm_to_vmem [thread:$0]  %s0, 64, %s21, [#allocation3]
    $region5: #{tpu_custom_call.1} parent=1 // pred_fallthru
      _
    // Predicated region
    $region6: #{tpu_custom_call.1} parent=1 // pred_check
      _
    $region7: #{tpu_custom_call.1} parent=1 // pred_check_branch
      %25 = sbr.rel (0) target = $region9
    $region8: #{tpu_custom_call.1} parent=1 // pred_region
      %s27 = ssub.s32 1024, 1024
      %28 = vsyncadd [#allocation6], %s27
      %s29 = sshll.u32 [#allocation5], 4
      %s30 = int_to_ptr.vmem [resolvable:$true] %s29
      %35 = dma.hbm_to_vmem [thread:$0]  %s1, 1024, %s30, [#allocation6], 256, 256, 16
    $region9: #{tpu_custom_call.1} parent=1 // pred_fallthru
      _
    // Predicated region
    $region10: #{tpu_custom_call.1} parent=1 // pred_check
      _
    $region11: #{tpu_custom_call.1} parent=1 // pred_check_branch
      %37 = sbr.rel (0) target = $region13
    $region12: #{tpu_custom_call.1} parent=1 // pred_region
      %s39 = ssub.s32 64, 64
      %40 = vsyncadd [#allocation6], %s39
      %s42 = sshll.u32 [#allocation7], 4
      %s43 = int_to_ptr.vmem [resolvable:$true] %s42
      %45 = dma.hbm_to_vmem [thread:$0]  %s2, 64, %s43, [#allocation6]
    $region13: #{tpu_custom_call.1} parent=1 // pred_fallthru
      _
    // Predicated region
    $region14: #{tpu_custom_call.1} parent=1 // pred_check
      _
    $region15: #{tpu_custom_call.1} parent=1 // pred_check_branch
      %47 = sbr.rel (0) target = $region17
    $region16: #{tpu_custom_call.1} parent=1 // pred_region
      %s49 = ssub.s32 8192, 8192
      %50 = vsyncadd [#allocation9], %s49
      %s51 = sshll.u32 [#allocation8], 4
      %s52 = int_to_ptr.vmem [resolvable:$true] %s51
      %57 = dma.hbm_to_vmem [thread:$0]  %s3, 8192, %s52, [#allocation9], 128, 128, 8
    $region17: #{tpu_custom_call.1} parent=1 // pred_fallthru
      _
    // Predicated region
    $region18: #{tpu_custom_call.1} parent=1 // pred_check
      _
    $region19: #{tpu_custom_call.1} parent=1 // pred_check_branch
      %59 = sbr.rel (0) target = $region21
    $region20: #{tpu_custom_call.1} parent=1 // pred_region
      _
    $region21: #{tpu_custom_call.1} parent=1 // pred_fallthru
      _
    // Predicated region
    $region22: #{tpu_custom_call.1} parent=1 // pred_check
      _
    $region23: #{tpu_custom_call.1} parent=1 // pred_check_branch
      %61 = sbr.rel (0) target = $region25
    $region24: #{tpu_custom_call.1} parent=1 // pred_region
      %62 = dma.done [#allocation3], 64
    $region25: #{tpu_custom_call.1} parent=1 // pred_fallthru
      _
    // Predicated region
    $region26: #{tpu_custom_call.1} parent=1 // pred_check
      _
    $region27: #{tpu_custom_call.1} parent=1 // pred_check_branch
      %64 = sbr.rel (0) target = $region29
    $region28: #{tpu_custom_call.1} parent=1 // pred_region
      %65 = dma.done [#allocation6], 1024
    $region29: #{tpu_custom_call.1} parent=1 // pred_fallthru
      _
    // Predicated region
    $region30: #{tpu_custom_call.1} parent=1 // pred_check
      _
    $region31: #{tpu_custom_call.1} parent=1 // pred_check_branch
      %67 = sbr.rel (0) target = $region33
    $region32: #{tpu_custom_call.1} parent=1 // pred_region
      %68 = dma.done [#allocation6], 64
    $region33: #{tpu_custom_call.1} parent=1 // pred_fallthru
      _
    // Predicated region
    $region34: #{tpu_custom_call.1} parent=1 // pred_check
      _
    $region35: #{tpu_custom_call.1} parent=1 // pred_check_branch
      %70 = sbr.rel (0) target = $region37
    $region36: #{tpu_custom_call.1} parent=1 // pred_region
      %71 = dma.done [#allocation9], 8192
    $region37: #{tpu_custom_call.1} parent=1 // pred_fallthru
      _
    %v73 = vld [vmem:[#allocation2] sm:$0xf]
    %v74 = vld [vmem:[#allocation5] sm:$0xff]
    %v75 = vld [vmem:[#allocation5 + $0x8] sm:$0xff]
    %v76 = vld [vmem:[#allocation5 + $0x10] sm:$0xff]
    %v77 = vld [vmem:[#allocation5 + $0x18] sm:$0xff]
    %v78 = vld [vmem:[#allocation5 + $0x20] sm:$0xff]
    %v79 = vld [vmem:[#allocation5 + $0x28] sm:$0xff]
    %v80 = vld [vmem:[#allocation5 + $0x30] sm:$0xff]
    %v81 = vld [vmem:[#allocation5 + $0x38] sm:$0xff]
    %v82 = vld [vmem:[#allocation7] sm:$0xf]
    %v84 = vlaneseq
    %v85 = vshrl.u32 %v84, 7
    %v86 = vsub.s32 0, %v85
    %v87 = vrot.slane %v82, %v86
    %v88 = vlaneseq
    %v89 = vshrl.u32 %v88, 7
    %v90 = vsub.s32 1, %v89
    %v91 = vrot.slane %v82, %v90
    %v92 = vlaneseq
    %v93 = vshrl.u32 %v92, 7
    %v94 = vsub.s32 2, %v93
    %v95 = vrot.slane %v82, %v94
    %v96 = vlaneseq
    %v97 = vshrl.u32 %v96, 7
    %v98 = vsub.s32 3, %v97
    %v99 = vrot.slane %v82, %v98
    %v112 = vunpack.c.l.b16 %v74
    %v113 = vunpack.c.h.b16 %v74
    %v114 = vunpack.c.l.b16 %v75
    %v115 = vunpack.c.h.b16 %v75
    %v116 = vunpack.c.l.b16 %v76
    %v117 = vunpack.c.h.b16 %v76
    %v118 = vunpack.c.l.b16 %v77
    %v119 = vunpack.c.h.b16 %v77
    %v120 = vunpack.c.l.b16 %v78
    %v121 = vunpack.c.h.b16 %v78
    %v122 = vunpack.c.l.b16 %v79
    %v123 = vunpack.c.h.b16 %v79
    %v124 = vunpack.c.l.b16 %v80
    %v125 = vunpack.c.h.b16 %v80
    %v126 = vunpack.c.l.b16 %v81
    %v127 = vunpack.c.h.b16 %v81
    %v128 = vpack.c.b16 %v116, %v112
    %v129 = vpack.c.b16 %v117, %v113
    %v130 = vpack.c.b16 %v118, %v114
    %v131 = vpack.c.b16 %v119, %v115
    %v132 = vpack.c.b16 %v124, %v120
    %v133 = vpack.c.b16 %v125, %v121
    %v134 = vpack.c.b16 %v126, %v122
    %v135 = vpack.c.b16 %v127, %v123
    %vm144 = vcmask 261120
    %v146 = vsel %vm144, %v73, 0
    %148 = vmatprep.subr.bf16.mxu0 0
    %149 = vmatpush1.bf16.msra.mxu0 0
    %150 = vmatprep.subr.bf16.mxu0 0
    %151 = vmatpush1.bf16.msra.mxu0 0
    %152 = vmatprep.subr.bf16.mxu0 0
    %153 = vmatpush1.bf16.msra.mxu0 0
    %154 = vmatprep.subr.bf16.mxu0 0
    %155 = vmatpush1.bf16.msra.mxu0 0
    %156 = vmatprep.subr.bf16.mxu0 0
    %157 = vmatpush1.bf16.msra.mxu0 0
    %158 = vmatprep.subr.bf16.mxu0 0
    %159 = vmatpush1.bf16.msra.mxu0 0
    %160 = vmatprep.subr.bf16.mxu0 %v133
    %161 = vmatpush1.bf16.msra.mxu0 %v132
    %162 = vmatprep.subr.bf16.mxu0 %v129
    %163 = vmatpush1.bf16.msra.mxu0 %v128
    %164 = vmatprep.subr.bf16.mxu0 0
    %165 = vmatpush2.bf16.msra.mxu0 0
    %166 = vmatprep.subr.bf16.mxu0 0
    %167 = vmatpush2.bf16.msra.mxu0 0
    %168 = vmatprep.subr.bf16.mxu0 0
    %169 = vmatpush2.bf16.msra.mxu0 0
    %170 = vmatprep.subr.bf16.mxu0 0
    %171 = vmatpush2.bf16.msra.mxu0 0
    %172 = vmatprep.subr.bf16.mxu0 0
    %173 = vmatpush2.bf16.msra.mxu0 0
    %174 = vmatprep.subr.bf16.mxu0 0
    %175 = vmatpush2.bf16.msra.mxu0 0
    %176 = vmatprep.subr.bf16.mxu0 0
    %177 = vmatpush2.bf16.msra.mxu0 0
    %178 = vmatprep.subr.bf16.mxu0 0
    %179 = vmatpush2.bf16.msra.mxu0 0
    %180 = vmatprep.mubr.bf16.mxu0 0
    %181 = vmatmul.mubr.bf16.gmra.mxu0 %v146
    %v182 = vpop.f32.mrf.mxu0
    %v183 = vadd.f32 %v87, %v182
    %v184 = vpop.f32.mrf.mxu0
    %v185 = vadd.f32 %v91, %v184
    %v186 = vpop.f32.mrf.mxu0
    %v187 = vpop.f32.mrf.mxu0
    %188 = vdwg.mxu0
    %189 = vmatprep.subr.bf16.mxu0 0
    %190 = vmatpush1.bf16.msra.mxu0 0
    %191 = vmatprep.subr.bf16.mxu0 0
    %192 = vmatpush1.bf16.msra.mxu0 0
    %193 = vmatprep.subr.bf16.mxu0 0
    %194 = vmatpush1.bf16.msra.mxu0 0
    %195 = vmatprep.subr.bf16.mxu0 0
    %196 = vmatpush1.bf16.msra.mxu0 0
    %197 = vmatprep.subr.bf16.mxu0 0
    %198 = vmatpush1.bf16.msra.mxu0 0
    %199 = vmatprep.subr.bf16.mxu0 0
    %200 = vmatpush1.bf16.msra.mxu0 0
    %201 = vmatprep.subr.bf16.mxu0 %v135
    %202 = vmatpush1.bf16.msra.mxu0 %v134
    %203 = vmatprep.subr.bf16.mxu0 %v131
    %204 = vmatpush1.bf16.msra.mxu0 %v130
    %205 = vmatprep.subr.bf16.mxu0 0
    %206 = vmatpush2.bf16.msra.mxu0 0
    %207 = vmatprep.subr.bf16.mxu0 0
    %208 = vmatpush2.bf16.msra.mxu0 0
    %209 = vmatprep.subr.bf16.mxu0 0
    %210 = vmatpush2.bf16.msra.mxu0 0
    %211 = vmatprep.subr.bf16.mxu0 0
    %212 = vmatpush2.bf16.msra.mxu0 0
    %213 = vmatprep.subr.bf16.mxu0 0
    %214 = vmatpush2.bf16.msra.mxu0 0
    %215 = vmatprep.subr.bf16.mxu0 0
    %216 = vmatpush2.bf16.msra.mxu0 0
    %217 = vmatprep.subr.bf16.mxu0 0
    %218 = vmatpush2.bf16.msra.mxu0 0
    %219 = vmatprep.subr.bf16.mxu0 0
    %220 = vmatpush2.bf16.msra.mxu0 0
    %221 = vmatprep.mubr.bf16.mxu0 0
    %222 = vmatmul.mubr.bf16.gmra.mxu0 %v146
    %v223 = vpop.f32.mrf.mxu0
    %v224 = vadd.f32 %v95, %v223
    %v225 = vpop.f32.mrf.mxu0
    %v226 = vadd.f32 %v99, %v225
    %v227 = vpop.f32.mrf.mxu0
    %v228 = vpop.f32.mrf.mxu0
    %229 = vdwg.mxu0
    %v230 = vmax.f32 %v183, 0.0
    %v231 = vmax.f32 %v185, 0.0
    %v232 = vmax.f32 %v224, 0.0
    %v233 = vmax.f32 %v226, 0.0
    %v234 = vpack.c.bf16 %v230, %v230
    %v235 = vpack.c.bf16 %v231, %v231
    %v236 = vpack.c.bf16 %v232, %v232
    %v237 = vpack.c.bf16 %v233, %v233
    %v238 = vld [vmem:[#allocation8] sm:$0xff]
    %v239 = vld [vmem:[#allocation8 + $0x8] sm:$0xff]
    %v240 = vld [vmem:[#allocation8 + $0x10] sm:$0xff]
    %v241 = vld [vmem:[#allocation8 + $0x18] sm:$0xff]
    %v242 = vld [vmem:[#allocation8 + $0x20] sm:$0xff]
    %v243 = vld [vmem:[#allocation8 + $0x28] sm:$0xff]
    %v244 = vld [vmem:[#allocation8 + $0x30] sm:$0xff]
    %v245 = vld [vmem:[#allocation8 + $0x38] sm:$0xff]
    %v246 = vld [vmem:[#allocation8 + $0x40] sm:$0xff]
    %v247 = vld [vmem:[#allocation8 + $0x48] sm:$0xff]
    %v248 = vld [vmem:[#allocation8 + $0x50] sm:$0xff]
    %v249 = vld [vmem:[#allocation8 + $0x58] sm:$0xff]
    %v250 = vld [vmem:[#allocation8 + $0x60] sm:$0xff]
    %v251 = vld [vmem:[#allocation8 + $0x68] sm:$0xff]
    %v252 = vld [vmem:[#allocation8 + $0x70] sm:$0xff]
    %v253 = vld [vmem:[#allocation8 + $0x78] sm:$0xff]
    %v254 = vld [vmem:[#allocation8 + $0x80] sm:$0xff]
    %v255 = vld [vmem:[#allocation8 + $0x88] sm:$0xff]
    %v256 = vld [vmem:[#allocation8 + $0x90] sm:$0xff]
    %v257 = vld [vmem:[#allocation8 + $0x98] sm:$0xff]
    %v258 = vld [vmem:[#allocation8 + $0xa0] sm:$0xff]
    %v259 = vld [vmem:[#allocation8 + $0xa8] sm:$0xff]
    %v260 = vld [vmem:[#allocation8 + $0xb0] sm:$0xff]
    %v261 = vld [vmem:[#allocation8 + $0xb8] sm:$0xff]
    %v262 = vld [vmem:[#allocation8 + $0xc0] sm:$0xff]
    %v263 = vld [vmem:[#allocation8 + $0xc8] sm:$0xff]
    %v264 = vld [vmem:[#allocation8 + $0xd0] sm:$0xff]
    %v265 = vld [vmem:[#allocation8 + $0xd8] sm:$0xff]
    %v266 = vld [vmem:[#allocation8 + $0xe0] sm:$0xff]
    %v267 = vld [vmem:[#allocation8 + $0xe8] sm:$0xff]
    %v268 = vld [vmem:[#allocation8 + $0xf0] sm:$0xff]
    %v269 = vld [vmem:[#allocation8 + $0xf8] sm:$0xff]
    %v270 = vld [vmem:[#allocation8 + $0x100] sm:$0xff]
    %v271 = vld [vmem:[#allocation8 + $0x108] sm:$0xff]
    %v272 = vld [vmem:[#allocation8 + $0x110] sm:$0xff]
    %v273 = vld [vmem:[#allocation8 + $0x118] sm:$0xff]
    %v274 = vld [vmem:[#allocation8 + $0x120] sm:$0xff]
    %v275 = vld [vmem:[#allocation8 + $0x128] sm:$0xff]
    %v276 = vld [vmem:[#allocation8 + $0x130] sm:$0xff]
    %v277 = vld [vmem:[#allocation8 + $0x138] sm:$0xff]
    %v278 = vld [vmem:[#allocation8 + $0x140] sm:$0xff]
    %v279 = vld [vmem:[#allocation8 + $0x148] sm:$0xff]
    %v280 = vld [vmem:[#allocation8 + $0x150] sm:$0xff]
    %v281 = vld [vmem:[#allocation8 + $0x158] sm:$0xff]
    %v282 = vld [vmem:[#allocation8 + $0x160] sm:$0xff]
    %v283 = vld [vmem:[#allocation8 + $0x168] sm:$0xff]
    %v284 = vld [vmem:[#allocation8 + $0x170] sm:$0xff]
    %v285 = vld [vmem:[#allocation8 + $0x178] sm:$0xff]
    %v286 = vld [vmem:[#allocation8 + $0x180] sm:$0xff]
    %v287 = vld [vmem:[#allocation8 + $0x188] sm:$0xff]
    %v288 = vld [vmem:[#allocation8 + $0x190] sm:$0xff]
    %v289 = vld [vmem:[#allocation8 + $0x198] sm:$0xff]
    %v290 = vld [vmem:[#allocation8 + $0x1a0] sm:$0xff]
    %v291 = vld [vmem:[#allocation8 + $0x1a8] sm:$0xff]
    %v292 = vld [vmem:[#allocation8 + $0x1b0] sm:$0xff]
    %v293 = vld [vmem:[#allocation8 + $0x1b8] sm:$0xff]
    %v294 = vld [vmem:[#allocation8 + $0x1c0] sm:$0xff]
    %v295 = vld [vmem:[#allocation8 + $0x1c8] sm:$0xff]
    %v296 = vld [vmem:[#allocation8 + $0x1d0] sm:$0xff]
    %v297 = vld [vmem:[#allocation8 + $0x1d8] sm:$0xff]
    %v298 = vld [vmem:[#allocation8 + $0x1e0] sm:$0xff]
    %v299 = vld [vmem:[#allocation8 + $0x1e8] sm:$0xff]
    %v300 = vld [vmem:[#allocation8 + $0x1f0] sm:$0xff]
    %v301 = vld [vmem:[#allocation8 + $0x1f8] sm:$0xff]
    %v302 = vld [vmem:[%s4] sm:$0x3]
    %v304 = vlaneseq
    %v305 = vshrl.u32 %v304, 7
    %v306 = vsub.s32 0, %v305
    %v307 = vrot.slane %v302, %v306
    %v308 = vlaneseq
    %v309 = vshrl.u32 %v308, 7
    %v310 = vsub.s32 1, %v309
    %v311 = vrot.slane %v302, %v310
    %v378 = vunpack.c.l.b16 %v238
    %v379 = vunpack.c.h.b16 %v238
    %v380 = vunpack.c.l.b16 %v239
    %v381 = vunpack.c.h.b16 %v239
    %v382 = vunpack.c.l.b16 %v240
    %v383 = vunpack.c.h.b16 %v240
    %v384 = vunpack.c.l.b16 %v241
    %v385 = vunpack.c.h.b16 %v241
    %v386 = vunpack.c.l.b16 %v242
    %v387 = vunpack.c.h.b16 %v242
    %v388 = vunpack.c.l.b16 %v243
    %v389 = vunpack.c.h.b16 %v243
    %v390 = vunpack.c.l.b16 %v244
    %v391 = vunpack.c.h.b16 %v244
    %v392 = vunpack.c.l.b16 %v245
    %v393 = vunpack.c.h.b16 %v245
    %v394 = vunpack.c.l.b16 %v246
    %v395 = vunpack.c.h.b16 %v246
    %v396 = vunpack.c.l.b16 %v247
    %v397 = vunpack.c.h.b16 %v247
    %v398 = vunpack.c.l.b16 %v248
    %v399 = vunpack.c.h.b16 %v248
    %v400 = vunpack.c.l.b16 %v249
    %v401 = vunpack.c.h.b16 %v249
    %v402 = vunpack.c.l.b16 %v250
    %v403 = vunpack.c.h.b16 %v250
    %v404 = vunpack.c.l.b16 %v251
    %v405 = vunpack.c.h.b16 %v251
    %v406 = vunpack.c.l.b16 %v252
    %v407 = vunpack.c.h.b16 %v252
    %v408 = vunpack.c.l.b16 %v253
    %v409 = vunpack.c.h.b16 %v253
    %v410 = vunpack.c.l.b16 %v254
    %v411 = vunpack.c.h.b16 %v254
    %v412 = vunpack.c.l.b16 %v255
    %v413 = vunpack.c.h.b16 %v255
    %v414 = vunpack.c.l.b16 %v256
    %v415 = vunpack.c.h.b16 %v256
    %v416 = vunpack.c.l.b16 %v257
    %v417 = vunpack.c.h.b16 %v257
    %v418 = vunpack.c.l.b16 %v258
    %v419 = vunpack.c.h.b16 %v258
    %v420 = vunpack.c.l.b16 %v259
    %v421 = vunpack.c.h.b16 %v259
    %v422 = vunpack.c.l.b16 %v260
    %v423 = vunpack.c.h.b16 %v260
    %v424 = vunpack.c.l.b16 %v261
    %v425 = vunpack.c.h.b16 %v261
    %v426 = vunpack.c.l.b16 %v262
    %v427 = vunpack.c.h.b16 %v262
    %v428 = vunpack.c.l.b16 %v263
    %v429 = vunpack.c.h.b16 %v263
    %v430 = vunpack.c.l.b16 %v264
    %v431 = vunpack.c.h.b16 %v264
    %v432 = vunpack.c.l.b16 %v265
    %v433 = vunpack.c.h.b16 %v265
    %v434 = vunpack.c.l.b16 %v266
    %v435 = vunpack.c.h.b16 %v266
    %v436 = vunpack.c.l.b16 %v267
    %v437 = vunpack.c.h.b16 %v267
    %v438 = vunpack.c.l.b16 %v268
    %v439 = vunpack.c.h.b16 %v268
    %v440 = vunpack.c.l.b16 %v269
    %v441 = vunpack.c.h.b16 %v269
    %v442 = vunpack.c.l.b16 %v270
    %v443 = vunpack.c.h.b16 %v270
    %v444 = vunpack.c.l.b16 %v271
    %v445 = vunpack.c.h.b16 %v271
    %v446 = vunpack.c.l.b16 %v272
    %v447 = vunpack.c.h.b16 %v272
    %v448 = vunpack.c.l.b16 %v273
    %v449 = vunpack.c.h.b16 %v273
    %v450 = vunpack.c.l.b16 %v274
    %v451 = vunpack.c.h.b16 %v274
    %v452 = vunpack.c.l.b16 %v275
    %v453 = vunpack.c.h.b16 %v275
    %v454 = vunpack.c.l.b16 %v276
    %v455 = vunpack.c.h.b16 %v276
    %v456 = vunpack.c.l.b16 %v277
    %v457 = vunpack.c.h.b16 %v277
    %v458 = vunpack.c.l.b16 %v278
    %v459 = vunpack.c.h.b16 %v278
    %v460 = vunpack.c.l.b16 %v279
    %v461 = vunpack.c.h.b16 %v279
    %v462 = vunpack.c.l.b16 %v280
    %v463 = vunpack.c.h.b16 %v280
    %v464 = vunpack.c.l.b16 %v281
    %v465 = vunpack.c.h.b16 %v281
    %v466 = vunpack.c.l.b16 %v282
    %v467 = vunpack.c.h.b16 %v282
    %v468 = vunpack.c.l.b16 %v283
    %v469 = vunpack.c.h.b16 %v283
    %v470 = vunpack.c.l.b16 %v284
    %v471 = vunpack.c.h.b16 %v284
    %v472 = vunpack.c.l.b16 %v285
    %v473 = vunpack.c.h.b16 %v285
    %v474 = vunpack.c.l.b16 %v286
    %v475 = vunpack.c.h.b16 %v286
    %v476 = vunpack.c.l.b16 %v287
    %v477 = vunpack.c.h.b16 %v287
    %v478 = vunpack.c.l.b16 %v288
    %v479 = vunpack.c.h.b16 %v288
    %v480 = vunpack.c.l.b16 %v289
    %v481 = vunpack.c.h.b16 %v289
    %v482 = vunpack.c.l.b16 %v290
    %v483 = vunpack.c.h.b16 %v290
    %v484 = vunpack.c.l.b16 %v291
    %v485 = vunpack.c.h.b16 %v291
    %v486 = vunpack.c.l.b16 %v292
    %v487 = vunpack.c.h.b16 %v292
    %v488 = vunpack.c.l.b16 %v293
    %v489 = vunpack.c.h.b16 %v293
    %v490 = vunpack.c.l.b16 %v294
    %v491 = vunpack.c.h.b16 %v294
    %v492 = vunpack.c.l.b16 %v295
    %v493 = vunpack.c.h.b16 %v295
    %v494 = vunpack.c.l.b16 %v296
    %v495 = vunpack.c.h.b16 %v296
    %v496 = vunpack.c.l.b16 %v297
    %v497 = vunpack.c.h.b16 %v297
    %v498 = vunpack.c.l.b16 %v298
    %v499 = vunpack.c.h.b16 %v298
    %v500 = vunpack.c.l.b16 %v299
    %v501 = vunpack.c.h.b16 %v299
    %v502 = vunpack.c.l.b16 %v300
    %v503 = vunpack.c.h.b16 %v300
    %v504 = vunpack.c.l.b16 %v301
    %v505 = vunpack.c.h.b16 %v301
    %v506 = vpack.c.b16 %v380, %v378
    %v507 = vpack.c.b16 %v381, %v379
    %v508 = vpack.c.b16 %v384, %v382
    %v509 = vpack.c.b16 %v385, %v383
    %v510 = vpack.c.b16 %v388, %v386
    %v511 = vpack.c.b16 %v389, %v387
    %v512 = vpack.c.b16 %v392, %v390
    %v513 = vpack.c.b16 %v393, %v391
    %v514 = vpack.c.b16 %v396, %v394
    %v515 = vpack.c.b16 %v397, %v395
    %v516 = vpack.c.b16 %v400, %v398
    %v517 = vpack.c.b16 %v401, %v399
    %v518 = vpack.c.b16 %v404, %v402
    %v519 = vpack.c.b16 %v405, %v403
    %v520 = vpack.c.b16 %v408, %v406
    %v521 = vpack.c.b16 %v409, %v407
    %v522 = vpack.c.b16 %v412, %v410
    %v523 = vpack.c.b16 %v413, %v411
    %v524 = vpack.c.b16 %v416, %v414
    %v525 = vpack.c.b16 %v417, %v415
    %v526 = vpack.c.b16 %v420, %v418
    %v527 = vpack.c.b16 %v421, %v419
    %v528 = vpack.c.b16 %v424, %v422
    %v529 = vpack.c.b16 %v425, %v423
    %v530 = vpack.c.b16 %v428, %v426
    %v531 = vpack.c.b16 %v429, %v427
    %v532 = vpack.c.b16 %v432, %v430
    %v533 = vpack.c.b16 %v433, %v431
    %v534 = vpack.c.b16 %v436, %v434
    %v535 = vpack.c.b16 %v437, %v435
    %v536 = vpack.c.b16 %v440, %v438
    %v537 = vpack.c.b16 %v441, %v439
    %v538 = vpack.c.b16 %v444, %v442
    %v539 = vpack.c.b16 %v445, %v443
    %v540 = vpack.c.b16 %v448, %v446
    %v541 = vpack.c.b16 %v449, %v447
    %v542 = vpack.c.b16 %v452, %v450
    %v543 = vpack.c.b16 %v453, %v451
    %v544 = vpack.c.b16 %v456, %v454
    %v545 = vpack.c.b16 %v457, %v455
    %v546 = vpack.c.b16 %v460, %v458
    %v547 = vpack.c.b16 %v461, %v459
    %v548 = vpack.c.b16 %v464, %v462
    %v549 = vpack.c.b16 %v465, %v463
    %v550 = vpack.c.b16 %v468, %v466
    %v551 = vpack.c.b16 %v469, %v467
    %v552 = vpack.c.b16 %v472, %v470
    %v553 = vpack.c.b16 %v473, %v471
    %v554 = vpack.c.b16 %v476, %v474
    %v555 = vpack.c.b16 %v477, %v475
    %v556 = vpack.c.b16 %v480, %v478
    %v557 = vpack.c.b16 %v481, %v479
    %v558 = vpack.c.b16 %v484, %v482
    %v559 = vpack.c.b16 %v485, %v483
    %v560 = vpack.c.b16 %v488, %v486
    %v561 = vpack.c.b16 %v489, %v487
    %v562 = vpack.c.b16 %v492, %v490
    %v563 = vpack.c.b16 %v493, %v491
    %v564 = vpack.c.b16 %v496, %v494
    %v565 = vpack.c.b16 %v497, %v495
    %v566 = vpack.c.b16 %v500, %v498
    %v567 = vpack.c.b16 %v501, %v499
    %v568 = vpack.c.b16 %v504, %v502
    %v569 = vpack.c.b16 %v505, %v503
    %634 = vmatprep.subr.bf16.mxu0 %v521
    %635 = vmatpush1.bf16.msra.mxu0 %v520
    %636 = vmatprep.subr.bf16.mxu0 %v519
    %637 = vmatpush1.bf16.msra.mxu0 %v518
    %638 = vmatprep.subr.bf16.mxu0 %v517
    %639 = vmatpush1.bf16.msra.mxu0 %v516
    %640 = vmatprep.subr.bf16.mxu0 %v515
    %641 = vmatpush1.bf16.msra.mxu0 %v514
    %642 = vmatprep.subr.bf16.mxu0 %v513
    %643 = vmatpush1.bf16.msra.mxu0 %v512
    %644 = vmatprep.subr.bf16.mxu0 %v511
    %645 = vmatpush1.bf16.msra.mxu0 %v510
    %646 = vmatprep.subr.bf16.mxu0 %v509
    %647 = vmatpush1.bf16.msra.mxu0 %v508
    %648 = vmatprep.subr.bf16.mxu0 %v507
    %649 = vmatpush1.bf16.msra.mxu0 %v506
    %650 = vmatprep.subr.bf16.mxu0 %v537
    %651 = vmatpush2.bf16.msra.mxu0 %v536
    %652 = vmatprep.subr.bf16.mxu0 %v535
    %653 = vmatpush2.bf16.msra.mxu0 %v534
    %654 = vmatprep.subr.bf16.mxu0 %v533
    %655 = vmatpush2.bf16.msra.mxu0 %v532
    %656 = vmatprep.subr.bf16.mxu0 %v531
    %657 = vmatpush2.bf16.msra.mxu0 %v530
    %658 = vmatprep.subr.bf16.mxu0 %v529
    %659 = vmatpush2.bf16.msra.mxu0 %v528
    %660 = vmatprep.subr.bf16.mxu0 %v527
    %661 = vmatpush2.bf16.msra.mxu0 %v526
    %662 = vmatprep.subr.bf16.mxu0 %v525
    %663 = vmatpush2.bf16.msra.mxu0 %v524
    %664 = vmatprep.subr.bf16.mxu0 %v523
    %665 = vmatpush2.bf16.msra.mxu0 %v522
    %666 = vmatprep.mubr.bf16.mxu0 %v235
    %667 = vmatmul.mubr.bf16.gmra.mxu0 %v234
    %v668 = vpop.f32.mrf.mxu0
    %v669 = vadd.f32 %v307, %v668
    %v670 = vpop.f32.mrf.mxu0
    %v671 = vadd.f32 %v311, %v670
    %v672 = vpop.f32.mrf.mxu0
    %v673 = vpop.f32.mrf.mxu0
    %674 = vdwg.mxu0
    %675 = vmatprep.subr.bf16.mxu0 %v553
    %676 = vmatpush1.bf16.msra.mxu0 %v552
    %677 = vmatprep.subr.bf16.mxu0 %v551
    %678 = vmatpush1.bf16.msra.mxu0 %v550
    %679 = vmatprep.subr.bf16.mxu0 %v549
    %680 = vmatpush1.bf16.msra.mxu0 %v548
    %681 = vmatprep.subr.bf16.mxu0 %v547
    %682 = vmatpush1.bf16.msra.mxu0 %v546
    %683 = vmatprep.subr.bf16.mxu0 %v545
    %684 = vmatpush1.bf16.msra.mxu0 %v544
    %685 = vmatprep.subr.bf16.mxu0 %v543
    %686 = vmatpush1.bf16.msra.mxu0 %v542
    %687 = vmatprep.subr.bf16.mxu0 %v541
    %688 = vmatpush1.bf16.msra.mxu0 %v540
    %689 = vmatprep.subr.bf16.mxu0 %v539
    %690 = vmatpush1.bf16.msra.mxu0 %v538
    %691 = vmatprep.subr.bf16.mxu0 %v569
    %692 = vmatpush2.bf16.msra.mxu0 %v568
    %693 = vmatprep.subr.bf16.mxu0 %v567
    %694 = vmatpush2.bf16.msra.mxu0 %v566
    %695 = vmatprep.subr.bf16.mxu0 %v565
    %696 = vmatpush2.bf16.msra.mxu0 %v564
    %697 = vmatprep.subr.bf16.mxu0 %v563
    %698 = vmatpush2.bf16.msra.mxu0 %v562
    %699 = vmatprep.subr.bf16.mxu0 %v561
    %700 = vmatpush2.bf16.msra.mxu0 %v560
    %701 = vmatprep.subr.bf16.mxu0 %v559
    %702 = vmatpush2.bf16.msra.mxu0 %v558
    %703 = vmatprep.subr.bf16.mxu0 %v557
    %704 = vmatpush2.bf16.msra.mxu0 %v556
    %705 = vmatprep.subr.bf16.mxu0 %v555
    %706 = vmatpush2.bf16.msra.mxu0 %v554
    %707 = vmatprep.mubr.bf16.mxu0 %v237
    %708 = vmatmul.mubr.bf16.gmra.mxu0 %v236
    %v709 = vpop.f32.mrf.mxu0
    %v710 = vadd.f32 %v669, %v709
    %v711 = vpop.f32.mrf.mxu0
    %v712 = vadd.f32 %v671, %v711
    %v713 = vpop.f32.mrf.mxu0
    %v714 = vpop.f32.mrf.mxu0
    %715 = vdwg.mxu0
    %716 = vst [vmem:[#allocation10] sm:$0xff] %v710
    %717 = vst [vmem:[#allocation10 + $0x8] sm:$0xff] %v712
    // Predicated region
    $region38: #{tpu_custom_call.1} parent=1 // pred_check
      _
    $region39: #{tpu_custom_call.1} parent=1 // pred_check_branch
      %719 = sbr.rel (0) target = $region41
    $region40: #{tpu_custom_call.1} parent=1 // pred_region
      %s721 = ssub.s32 256, 256
      %722 = vsyncadd [#allocation4], %s721
      %s724 = sshll.u32 [#allocation10], 4
      %s725 = int_to_ptr.vmem [resolvable:$true] %s724
      %727 = dma.vmem_to_hbm [thread:$0]  %s725, 256, %s5, [#allocation4]
    $region41: #{tpu_custom_call.1} parent=1 // pred_fallthru
      _
    // Predicated region
    $region42: #{tpu_custom_call.1} parent=1 // pred_check
      _
    $region43: #{tpu_custom_call.1} parent=1 // pred_check_branch
      %729 = sbr.rel (0) target = $region45
    $region44: #{tpu_custom_call.1} parent=1 // pred_region
      %730 = dma.done [#allocation4], 256
    $region45: #{tpu_custom_call.1} parent=1 // pred_fallthru
      _
    %731 = vsyncpa [#allocation3], 1
    %732 = vsyncpa [#allocation6], 1
    %733 = vsyncpa [#allocation9], 1
    %734 = vsyncpa [#allocation4], 1

</llo_original>
